<compile_context>
chip_gen: v7x
topology: tpu7x:2x2x1
jax: 0.10.0
libtpu: 0.0.40
codegen_flags: <defaults>
</compile_context>

<pallas_src>
import functools

import jax
import jax.numpy as jnp
from jax.experimental import pallas as pl
from jax.experimental.pallas import tpu as pltpu


# ----------------------------------------------------------------------------
# One-time (weight-load-time) parameter preparation
# ----------------------------------------------------------------------------
def pack_int4_weight(weight_q, group_size):
    """Repack (N, K) int32 codes 0..15 -> (K//8, N) int32 with 8 codes per word.

    Within each quantization group of G rows (along K), the code at group offset
    j*(G//8)+i is stored in bits [4j, 4j+4) of packed row i of that group, so the
    kernel unpacks with 8 shift/mask ops plus sublane-aligned concatenates
    (no interleave / relayout).
    """
    N, K = weight_q.shape
    G = group_size
    assert K % G == 0 and G % 8 == 0
    wq_t = weight_q.T.astype(jnp.int32)                  # (K, N) -- done once, offline
    grp = wq_t.reshape(K // G, 8, G // 8, N)             # [g, j, i, n]
    packed = jnp.zeros((K // G, G // 8, N), jnp.int32)
    for j in range(8):
        packed = packed | (grp[:, j] << (4 * j))
    return packed.reshape(K // 8, N)


def prepare_int4_params(weight_q, scales_and_zeros, bias, group_size):
    """One-time repack of the module parameters for the TPU kernel."""
    N = weight_q.shape[0]
    wq_packed = pack_int4_weight(weight_q, group_size)            # (K//8, N) int32
    scales = jnp.asarray(scales_and_zeros[..., 0], jnp.float32)   # (K//G, N)
    zeros = jnp.asarray(scales_and_zeros[..., 1], jnp.float32)    # (K//G, N)
    zeros_eff = zeros - 8.0 * scales                              # fold the -8 offset offline
    if bias is None:
        bias = jnp.zeros((N,), jnp.float32)
    bias2 = jnp.asarray(bias, jnp.float32).reshape(1, N)
    return wq_packed, scales, zeros_eff, bias2


# ----------------------------------------------------------------------------
# Kernel
# ----------------------------------------------------------------------------
def _int4_linear_kernel(x_ref, wq_ref, sc_ref, ze_ref, b_ref, o_ref, *scratch,
                        group_size, groups_per_tile, acc_in_out):
    k = pl.program_id(2)
    acc_ref = o_ref if acc_in_out else scratch[0]

    # Bias folded into the resident accumulator init (no epilogue add).
    @pl.when(k == 0)
    def _():
        acc_ref[...] = jnp.broadcast_to(
            b_ref[...].astype(acc_ref.dtype), acc_ref.shape)

    G = group_size
    rpg = G // 8  # packed sublane rows per quantization group

    # Build ONE (tk, tn) bf16 dequantized weight operand for this K tile.
    w_parts = []
    for gi in range(groups_per_tile):  # static unroll; wrapper keeps gpt modest
        packed = wq_ref[gi * rpg:(gi + 1) * rpg, :]                    # (G//8, tn) int32
        scale = sc_ref[gi:gi + 1, :]                                   # (1, tn) f32
        zeff = ze_ref[gi:gi + 1, :]                                    # (1, tn) f32 (= zero - 8*scale)
        q = jnp.concatenate(
            [(packed >> (4 * j)) & 0xF for j in range(8)], axis=0)     # (G, tn), codes 0..15
        w_parts.append((q.astype(jnp.float32) * scale + zeff).astype(jnp.bfloat16))
    w_tile = w_parts[0] if groups_per_tile == 1 else jnp.concatenate(w_parts, axis=0)

    # Single MXU matmul and single accumulator update per grid step.
    acc_ref[...] += jnp.dot(x_ref[...], w_tile,
                            preferred_element_type=jnp.float32).astype(acc_ref.dtype)

    if not acc_in_out:
        @pl.when(k == pl.num_programs(2) - 1)
        def _():
            o_ref[...] = acc_ref[...].astype(o_ref.dtype)


# ----------------------------------------------------------------------------
# Wrapper
# ----------------------------------------------------------------------------
def _largest_legal_gpt(n_groups, G, max_tk):
    """Largest groups-per-K-tile giving (8,128)-legal blocks with tk <= max_tk."""
    if n_groups * G <= max_tk:
        return n_groups                       # full-K tile (always block-legal)
    for d in range(n_groups - 1, 0, -1):
        tk = d * G
        if (n_groups % d == 0 and tk <= max_tk and d % 8 == 0
                and tk % 128 == 0 and (tk // 8) % 8 == 0):
            return d
    return n_groups                           # fall back to a full-K tile


def int4_linear(x, wq_packed, scales, zeros_eff, bias2, group_size):
    """y = x @ dequant(w).T + bias with pre-packed int4 weights (see prepare_int4_params)."""
    orig_shape = x.shape
    K = orig_shape[-1]
    N = wq_packed.shape[1]
    G = group_size
    assert K % G == 0, "in_features must be divisible by group_size"
    assert wq_packed.shape[0] * 8 == K
    assert N % 128 == 0, "out_features must be a multiple of 128 for the TPU kernel"
    n_groups = K // G
    out_dtype = x.dtype

    # Cast x to bf16 once (the MXU consumes bf16 anyway): halves x HBM/VMEM traffic.
    x2 = x.reshape(-1, K).astype(jnp.bfloat16)
    M = x2.shape[0]
    decode = M <= 64

    # ---- N tile: lane-dense; prefer >= 2 N tiles so v7x's 2 TensorCores both get work ----
    tn = None
    if decode:
        for c in (512, 256, 128):
            if N % c == 0 and N // c >= 2:
                tn = c
                break
    if tn is None:
        tn = 256 if N % 256 == 0 else 128
    tn = min(tn, N)

    # ---- K tile: decode -> few big steps (kill per-step overhead); prefill -> ~8 groups ----
    max_tk = 4096 if decode else 1024
    gpt = _largest_legal_gpt(n_groups, G, max_tk)
    tk = gpt * G

    # ---- M tile: tm=512 for prefill amortizes the per-tile weight unpack ----
    if M >= 512:
        tm = 512
    elif M > 256:
        tm = 256
    else:
        tm = max(8, ((M + 7) // 8) * 8)
    Mp = ((M + tm - 1) // tm) * tm
    if Mp != M:
        x2 = jnp.pad(x2, ((0, Mp - M), (0, 0)))

    acc_in_out = (out_dtype == jnp.float32)   # accumulate directly into o_ref when f32
    grid = (Mp // tm, N // tn, K // tk)

    kernel = functools.partial(
        _int4_linear_kernel,
        group_size=G, groups_per_tile=gpt, acc_in_out=acc_in_out)

    # ---- VMEM budget derived from hardware, with headroom ----
    try:
        cap = int(getattr(pltpu.get_tpu_info(), "vmem_capacity_bytes", 64 << 20))
    except Exception:
        cap = 64 << 20                        # conservative (v7x per-core VMEM)
    out_bytes = jnp.dtype(out_dtype).itemsize
    est = (2 * (tm * tk * 2                   # x (bf16), double-buffered
                + (tk // 8) * tn * 4          # packed int4 weights
                + 2 * max(8, gpt) * tn * 4    # scales + zeros_eff
                + 8 * tn * 4)                 # bias
           + 2 * tm * tn * out_bytes          # output
           + (0 if acc_in_out else tm * tn * 4)
           + tk * tn * 2                      # in-kernel dequantized bf16 weight operand
           + 4 * G * tn * 4)                  # per-group f32 temporaries
    vmem_limit = int(min(int(0.7 * cap), max(32 << 20, 2 * est)))

    scratch = [] if acc_in_out else [pltpu.VMEM((tm, tn), jnp.float32)]

    out = pl.pallas_call(
        kernel,
        out_shape=jax.ShapeDtypeStruct((Mp, N), out_dtype),
        grid_spec=pltpu.PrefetchScalarGridSpec(
            num_scalar_prefetch=0,
            grid=grid,
            in_specs=[
                pl.BlockSpec((tm, tk), lambda i, j, k: (i, k)),        # x tile (bf16)
                pl.BlockSpec((tk // 8, tn), lambda i, j, k: (k, j)),   # packed int4 codes
                pl.BlockSpec((gpt, tn), lambda i, j, k: (k, j)),       # scales for this K tile
                pl.BlockSpec((gpt, tn), lambda i, j, k: (k, j)),       # zeros_eff for this K tile
                pl.BlockSpec((1, tn), lambda i, j, k: (0, j)),         # bias
            ],
            out_specs=pl.BlockSpec((tm, tn), lambda i, j, k: (i, j)),
            scratch_shapes=scratch,
        ),
        compiler_params=pltpu.CompilerParams(
            dimension_semantics=("parallel", "parallel", "arbitrary"),
            vmem_limit_bytes=vmem_limit,
        ),
    )(x2, wq_packed, scales, zeros_eff, bias2)

    if Mp != M:
        out = out[:M]
    return out.reshape(*orig_shape[:-1], N)


# ----------------------------------------------------------------------------
# Test
# ----------------------------------------------------------------------------
if __name__ == "__main__":
    batch, seq = 2, 8
    in_features, out_features, group_size = 256, 128, 128

    key = jax.random.PRNGKey(0)
    kx, kw, ks, kz, kb = jax.random.split(key, 5)

    x = jax.random.normal(kx, (batch, seq, in_features), dtype=jnp.float32)
    # int4 codes stored in an int32 container, as in the PyTorch module.
    weight_q = jax.random.randint(kw, (out_features, in_features), 0, 16, dtype=jnp.int32)
    scales = jax.random.uniform(
        ks, (in_features // group_size, out_features), jnp.float32, 0.01, 0.05)
    zeros = jax.random.normal(kz, (in_features // group_size, out_features), jnp.float32) * 0.1
    scales_and_zeros = jnp.stack([scales, zeros], axis=-1)       # (K//G, N, 2)
    bias = jax.random.normal(kb, (out_features,), dtype=jnp.float32) * 0.1

    # TODO(synk): tinygemm's m16n8k16 CUDA tensor-core weight relayout (reshape_weight)
    # has no TPU analogue; the TPU-friendly one-time relayout is the int4 nibble packing.
    wq_packed, sc, zeff, b2 = prepare_int4_params(weight_q, scales_and_zeros, bias, group_size)

    y = int4_linear(x, wq_packed, sc, zeff, b2, group_size)
    jax.block_until_ready(y)

    # Pure-JAX f32 reference (exact dequant).
    scale_full = jnp.repeat(scales, group_size, axis=0)          # (K, N)
    zero_full = jnp.repeat(zeros, group_size, axis=0)            # (K, N)
    w_deq_t = (weight_q.T.astype(jnp.float32) - 8.0) * scale_full + zero_full
    y_ref = (x.reshape(-1, in_features) @ w_deq_t + bias).reshape(batch, seq, out_features)

    assert y.shape == (batch, seq, out_features)
    err = float(jnp.max(jnp.abs(y - y_ref)))
    # Kernel runs with bf16 x and bf16 dequantized weights on the MXU (f32 accumulation),
    # matching tinygemm's reduced-precision dequant semantics -> bf16-level tolerance.
    assert jnp.allclose(y, y_ref, rtol=2e-2, atol=5e-2), f"max abs err {err}"
    print("KERNEL_OK")
</pallas_src>

<mosaic_0001>
module attributes {stable_mosaic.version = 11 : i64} {
  func.func @_int4_linear_kernel(%arg0: i32, %arg1: i32, %arg2: i32, %arg3: memref<16x256xbf16, #tpu.memory_space<vmem>>, %arg4: memref<32x128xi32, #tpu.memory_space<vmem>>, %arg5: memref<2x128xf32, #tpu.memory_space<vmem>>, %arg6: memref<2x128xf32, #tpu.memory_space<vmem>>, %arg7: memref<1x128xf32, #tpu.memory_space<vmem>>, %arg8: memref<16x128xf32, #tpu.memory_space<vmem>>) attributes {dimension_semantics = [#tpu.dimension_semantics<parallel>, #tpu.dimension_semantics<parallel>, #tpu.dimension_semantics<arbitrary>], iteration_bounds = array<i64: 1, 1, 1>, scalar_prefetch = 0 : i64, scratch_operands = 0 : i64, tpu.core_type = #tpu.core_type<tc>, window_params = [{transform_indices = @transform_0, window_bounds = array<i64: 16, 256>}, {transform_indices = @transform_1, window_bounds = array<i64: 32, 128>}, {transform_indices = @transform_2, window_bounds = array<i64: 2, 128>}, {transform_indices = @transform_3, window_bounds = array<i64: 2, 128>}, {transform_indices = @transform_4, window_bounds = array<i64: 1, 128>}, {transform_indices = @transform_5, window_bounds = array<i64: 16, 128>}]} {
    %c0_i32 = arith.constant 0 : i32
    %0 = arith.cmpi eq, %arg2, %c0_i32 : i32
    %1 = arith.extui %0 : i1 to i32
    %c0_i32_0 = arith.constant 0 : i32
    %2 = arith.cmpi ne, %1, %c0_i32_0 : i32
    scf.if %2 {
      %c0_40 = arith.constant 0 : index
      %c0_41 = arith.constant 0 : index
      %93 = vector.load %arg7[%c0_40, %c0_41] : memref<1x128xf32, #tpu.memory_space<vmem>>, vector<1x128xf32>
      %94 = vector.shape_cast %93 : vector<1x128xf32> to vector<1x128xf32>
      %95 = vector.broadcast %94 : vector<1x128xf32> to vector<16x128xf32>
      %c0_42 = arith.constant 0 : index
      %c0_43 = arith.constant 0 : index
      %96 = vector.load %arg8[%c0_42, %c0_43] : memref<16x128xf32, #tpu.memory_space<vmem>>, vector<16x128xf32>
      tpu.vector_store %arg8[%c0_42, %c0_43], %95 {strides = array<i32>} : memref<16x128xf32, #tpu.memory_space<vmem>>, vector<16x128xf32>,
    } else {
    }
    %c0 = arith.constant 0 : index
    %c0_1 = arith.constant 0 : index
    %3 = vector.load %arg4[%c0, %c0_1] : memref<32x128xi32, #tpu.memory_space<vmem>>, vector<16x128xi32>
    %c0_2 = arith.constant 0 : index
    %c0_3 = arith.constant 0 : index
    %4 = vector.load %arg5[%c0_2, %c0_3] : memref<2x128xf32, #tpu.memory_space<vmem>>, vector<1x128xf32>
    %c0_4 = arith.constant 0 : index
    %c0_5 = arith.constant 0 : index
    %5 = vector.load %arg6[%c0_4, %c0_5] : memref<2x128xf32, #tpu.memory_space<vmem>>, vector<1x128xf32>
    %c0_i32_6 = arith.constant 0 : i32
    %6 = vector.broadcast %c0_i32_6 : i32 to vector<16x128xi32>
    %7 = arith.shrsi %3, %6 : vector<16x128xi32>
    %c15_i32 = arith.constant 15 : i32
    %8 = vector.broadcast %c15_i32 : i32 to vector<16x128xi32>
    %9 = arith.andi %7, %8 : vector<16x128xi32>
    %c4_i32 = arith.constant 4 : i32
    %10 = vector.broadcast %c4_i32 : i32 to vector<16x128xi32>
    %11 = arith.shrsi %3, %10 : vector<16x128xi32>
    %c15_i32_7 = arith.constant 15 : i32
    %12 = vector.broadcast %c15_i32_7 : i32 to vector<16x128xi32>
    %13 = arith.andi %11, %12 : vector<16x128xi32>
    %c8_i32 = arith.constant 8 : i32
    %14 = vector.broadcast %c8_i32 : i32 to vector<16x128xi32>
    %15 = arith.shrsi %3, %14 : vector<16x128xi32>
    %c15_i32_8 = arith.constant 15 : i32
    %16 = vector.broadcast %c15_i32_8 : i32 to vector<16x128xi32>
    %17 = arith.andi %15, %16 : vector<16x128xi32>
    %c12_i32 = arith.constant 12 : i32
    %18 = vector.broadcast %c12_i32 : i32 to vector<16x128xi32>
    %19 = arith.shrsi %3, %18 : vector<16x128xi32>
    %c15_i32_9 = arith.constant 15 : i32
    %20 = vector.broadcast %c15_i32_9 : i32 to vector<16x128xi32>
    %21 = arith.andi %19, %20 : vector<16x128xi32>
    %c16_i32 = arith.constant 16 : i32
    %22 = vector.broadcast %c16_i32 : i32 to vector<16x128xi32>
    %23 = arith.shrsi %3, %22 : vector<16x128xi32>
    %c15_i32_10 = arith.constant 15 : i32
    %24 = vector.broadcast %c15_i32_10 : i32 to vector<16x128xi32>
    %25 = arith.andi %23, %24 : vector<16x128xi32>
    %c20_i32 = arith.constant 20 : i32
    %26 = vector.broadcast %c20_i32 : i32 to vector<16x128xi32>
    %27 = arith.shrsi %3, %26 : vector<16x128xi32>
    %c15_i32_11 = arith.constant 15 : i32
    %28 = vector.broadcast %c15_i32_11 : i32 to vector<16x128xi32>
    %29 = arith.andi %27, %28 : vector<16x128xi32>
    %c24_i32 = arith.constant 24 : i32
    %30 = vector.broadcast %c24_i32 : i32 to vector<16x128xi32>
    %31 = arith.shrsi %3, %30 : vector<16x128xi32>
    %c15_i32_12 = arith.constant 15 : i32
    %32 = vector.broadcast %c15_i32_12 : i32 to vector<16x128xi32>
    %33 = arith.andi %31, %32 : vector<16x128xi32>
    %c28_i32 = arith.constant 28 : i32
    %34 = vector.broadcast %c28_i32 : i32 to vector<16x128xi32>
    %35 = arith.shrsi %3, %34 : vector<16x128xi32>
    %c15_i32_13 = arith.constant 15 : i32
    %36 = vector.broadcast %c15_i32_13 : i32 to vector<16x128xi32>
    %37 = arith.andi %35, %36 : vector<16x128xi32>
    %38 = tpu.concatenate %9, %13, %17, %21, %25, %29, %33, %37 in 0 : vector<16x128xi32>, vector<16x128xi32>, vector<16x128xi32>, vector<16x128xi32>, vector<16x128xi32>, vector<16x128xi32>, vector<16x128xi32>, vector<16x128xi32> -> vector<128x128xi32>
    %39 = arith.sitofp %38 : vector<128x128xi32> to vector<128x128xf32>
    %40 = vector.broadcast %4 : vector<1x128xf32> to vector<128x128xf32>
    %41 = arith.mulf %39, %40 : vector<128x128xf32>
    %42 = vector.broadcast %5 : vector<1x128xf32> to vector<128x128xf32>
    %43 = arith.addf %41, %42 : vector<128x128xf32>
    %44 = arith.truncf %43 : vector<128x128xf32> to vector<128x128xbf16>
    %c16 = arith.constant 16 : index
    %c0_14 = arith.constant 0 : index
    %45 = vector.load %arg4[%c16, %c0_14] : memref<32x128xi32, #tpu.memory_space<vmem>>, vector<16x128xi32>
    %c1 = arith.constant 1 : index
    %c0_15 = arith.constant 0 : index
    %46 = vector.load %arg5[%c1, %c0_15] : memref<2x128xf32, #tpu.memory_space<vmem>>, vector<1x128xf32>
    %c1_16 = arith.constant 1 : index
    %c0_17 = arith.constant 0 : index
    %47 = vector.load %arg6[%c1_16, %c0_17] : memref<2x128xf32, #tpu.memory_space<vmem>>, vector<1x128xf32>
    %c0_i32_18 = arith.constant 0 : i32
    %48 = vector.broadcast %c0_i32_18 : i32 to vector<16x128xi32>
    %49 = arith.shrsi %45, %48 : vector<16x128xi32>
    %c15_i32_19 = arith.constant 15 : i32
    %50 = vector.broadcast %c15_i32_19 : i32 to vector<16x128xi32>
    %51 = arith.andi %49, %50 : vector<16x128xi32>
    %c4_i32_20 = arith.constant 4 : i32
    %52 = vector.broadcast %c4_i32_20 : i32 to vector<16x128xi32>
    %53 = arith.shrsi %45, %52 : vector<16x128xi32>
    %c15_i32_21 = arith.constant 15 : i32
    %54 = vector.broadcast %c15_i32_21 : i32 to vector<16x128xi32>
    %55 = arith.andi %53, %54 : vector<16x128xi32>
    %c8_i32_22 = arith.constant 8 : i32
    %56 = vector.broadcast %c8_i32_22 : i32 to vector<16x128xi32>
    %57 = arith.shrsi %45, %56 : vector<16x128xi32>
    %c15_i32_23 = arith.constant 15 : i32
    %58 = vector.broadcast %c15_i32_23 : i32 to vector<16x128xi32>
    %59 = arith.andi %57, %58 : vector<16x128xi32>
    %c12_i32_24 = arith.constant 12 : i32
    %60 = vector.broadcast %c12_i32_24 : i32 to vector<16x128xi32>
    %61 = arith.shrsi %45, %60 : vector<16x128xi32>
    %c15_i32_25 = arith.constant 15 : i32
    %62 = vector.broadcast %c15_i32_25 : i32 to vector<16x128xi32>
    %63 = arith.andi %61, %62 : vector<16x128xi32>
    %c16_i32_26 = arith.constant 16 : i32
    %64 = vector.broadcast %c16_i32_26 : i32 to vector<16x128xi32>
    %65 = arith.shrsi %45, %64 : vector<16x128xi32>
    %c15_i32_27 = arith.constant 15 : i32
    %66 = vector.broadcast %c15_i32_27 : i32 to vector<16x128xi32>
    %67 = arith.andi %65, %66 : vector<16x128xi32>
    %c20_i32_28 = arith.constant 20 : i32
    %68 = vector.broadcast %c20_i32_28 : i32 to vector<16x128xi32>
    %69 = arith.shrsi %45, %68 : vector<16x128xi32>
    %c15_i32_29 = arith.constant 15 : i32
    %70 = vector.broadcast %c15_i32_29 : i32 to vector<16x128xi32>
    %71 = arith.andi %69, %70 : vector<16x128xi32>
    %c24_i32_30 = arith.constant 24 : i32
    %72 = vector.broadcast %c24_i32_30 : i32 to vector<16x128xi32>
    %73 = arith.shrsi %45, %72 : vector<16x128xi32>
    %c15_i32_31 = arith.constant 15 : i32
    %74 = vector.broadcast %c15_i32_31 : i32 to vector<16x128xi32>
    %75 = arith.andi %73, %74 : vector<16x128xi32>
    %c28_i32_32 = arith.constant 28 : i32
    %76 = vector.broadcast %c28_i32_32 : i32 to vector<16x128xi32>
    %77 = arith.shrsi %45, %76 : vector<16x128xi32>
    %c15_i32_33 = arith.constant 15 : i32
    %78 = vector.broadcast %c15_i32_33 : i32 to vector<16x128xi32>
    %79 = arith.andi %77, %78 : vector<16x128xi32>
    %80 = tpu.concatenate %51, %55, %59, %63, %67, %71, %75, %79 in 0 : vector<16x128xi32>, vector<16x128xi32>, vector<16x128xi32>, vector<16x128xi32>, vector<16x128xi32>, vector<16x128xi32>, vector<16x128xi32>, vector<16x128xi32> -> vector<128x128xi32>
    %81 = arith.sitofp %80 : vector<128x128xi32> to vector<128x128xf32>
    %82 = vector.broadcast %46 : vector<1x128xf32> to vector<128x128xf32>
    %83 = arith.mulf %81, %82 : vector<128x128xf32>
    %84 = vector.broadcast %47 : vector<1x128xf32> to vector<128x128xf32>
    %85 = arith.addf %83, %84 : vector<128x128xf32>
    %86 = arith.truncf %85 : vector<128x128xf32> to vector<128x128xbf16>
    %87 = tpu.concatenate %44, %86 in 0 : vector<128x128xbf16>, vector<128x128xbf16> -> vector<256x128xbf16>
    %c0_34 = arith.constant 0 : index
    %c0_35 = arith.constant 0 : index
    %88 = vector.load %arg8[%c0_34, %c0_35] : memref<16x128xf32, #tpu.memory_space<vmem>>, vector<16x128xf32>
    %c0_36 = arith.constant 0 : index
    %c0_37 = arith.constant 0 : index
    %89 = vector.load %arg3[%c0_36, %c0_37] : memref<16x256xbf16, #tpu.memory_space<vmem>>, vector<16x256xbf16>
    %cst = arith.constant dense<0.000000e+00> : vector<16x128xf32>
    %90 = tpu.matmul %89, %87, %cst {dimension_numbers = #tpu.dot_dimension_numbers<[1], [0], [0], [1], [0, 0, 1, 1], [], []>} : vector<16x256xbf16>, vector<256x128xbf16>, vector<16x128xf32> -> vector<16x128xf32>
    %91 = arith.addf %88, %90 : vector<16x128xf32>
    %c0_38 = arith.constant 0 : index
    %c0_39 = arith.constant 0 : index
    %92 = vector.load %arg8[%c0_38, %c0_39] : memref<16x128xf32, #tpu.memory_space<vmem>>, vector<16x128xf32>
    tpu.vector_store %arg8[%c0_38, %c0_39], %91 {strides = array<i32>} : memref<16x128xf32, #tpu.memory_space<vmem>>, vector<16x128xf32>,
    return
  }
  func.func @transform_0(%arg0: i32, %arg1: i32, %arg2: i32) -> (i32, i32) {
    %c0_i32 = arith.constant 0 : i32
    return %arg0, %arg2 : i32, i32
  }
  func.func @transform_1(%arg0: i32, %arg1: i32, %arg2: i32) -> (i32, i32) {
    %c0_i32 = arith.constant 0 : i32
    return %arg2, %arg1 : i32, i32
  }
  func.func @transform_2(%arg0: i32, %arg1: i32, %arg2: i32) -> (i32, i32) {
    %c0_i32 = arith.constant 0 : i32
    return %arg2, %arg1 : i32, i32
  }
  func.func @transform_3(%arg0: i32, %arg1: i32, %arg2: i32) -> (i32, i32) {
    %c0_i32 = arith.constant 0 : i32
    return %arg2, %arg1 : i32, i32
  }
  func.func @transform_4(%arg0: i32, %arg1: i32, %arg2: i32) -> (i32, i32) {
    %c0_i32 = arith.constant 0 : i32
    %c0_i32_0 = arith.constant 0 : i32
    return %c0_i32, %arg1 : i32, i32
  }
  func.func @transform_5(%arg0: i32, %arg1: i32, %arg2: i32) -> (i32, i32) {
    %c0_i32 = arith.constant 0 : i32
    return %arg0, %arg1 : i32, i32
  }
}

</mosaic_0001>

<llo_original>
// kernel: tpu_custom_call.1
$region0: #{tpu_custom_call.1}
  #allocation0 [shape = 'u32[]', space=smem, size = 0x4, offset = 0x4, fixed_abs, tag = 'smem constant byte address 0x4 - core index']
  #allocation1 [shape = 'u32[144,128]{1,0:T(1,128)}', space=vmem, size = 0x12000, scoped, tag = 'internal scratch']
  %s0 = inlined_call_operand.hbm [shape: bf16[16,256], index: 0, kind: input, shape index: {}]
  %s1 = inlined_call_operand.hbm [shape: s32[32,128], index: 1, kind: input, shape index: {}]
  %s2 = inlined_call_operand.vmem [shape: f32[2,128], index: 2, kind: input, shape index: {}]
  %s3 = inlined_call_operand.vmem [shape: f32[2,128], index: 3, kind: input, shape index: {}]
  %s4 = inlined_call_operand.vmem [shape: f32[1,128], index: 4, kind: input, shape index: {}]
  %s5 = inlined_call_operand.hbm [shape: f32[16,128], index: 5, kind: output, shape index: {}]
  %s6 = sld [smem:[#allocation0]]
  $region42: #{tpu_custom_call.1} parent=0
    _
  %s8 = ssub.s32 1, %s6
  %s9 = scalar_select 0, %s8, %s6
  $region1: #{tpu_custom_call.1} parent=0
    #allocation2 [shape = 'u8[8192]{0}', space=vmem, size = 0x2000, scoped, tag = 'input window, operand 0, single buffered']
    #allocation3 [shape = 's32[1]{0}', space=sflag, size = 0x4, scoped, tag = 'scoped memory for tpu_custom_call.1']
    #allocation4 [shape = 's32[1]{0}', space=sflag, size = 0x4, scoped, tag = 'scoped memory for tpu_custom_call.1']
    #allocation5 [shape = 'u8[16384]{0}', space=vmem, size = 0x4000, scoped, tag = 'input window, operand 1, single buffered']
    #allocation6 [shape = 's32[1]{0}', space=sflag, size = 0x4, scoped, tag = 'scoped memory for tpu_custom_call.1']
    #allocation7 [shape = 'u8[8192]{0}', space=vmem, size = 0x2000, scoped, tag = 'output window, operand 0, single buffered']
    %10 = vsyncpa [#allocation3], 0
    %11 = vsyncpa [#allocation6], 0
    %12 = vsyncpa [#allocation4], 0
    // Predicated region
    $region2: #{tpu_custom_call.1} parent=1 // pred_check
      _
    $region3: #{tpu_custom_call.1} parent=1 // pred_check_branch
      %14 = sbr.rel (0) target = $region5
    $region4: #{tpu_custom_call.1} parent=1 // pred_region
      %s16 = ssub.s32 256, 256
      %17 = vsyncadd [#allocation3], %s16
      %s18 = sshll.u32 [#allocation2], 4
      %s19 = int_to_ptr.vmem [resolvable:$true] %s18
      %24 = dma.hbm_to_vmem [thread:$0]  %s0, 256, %s19, [#allocation3], 128, 128, 8
    $region5: #{tpu_custom_call.1} parent=1 // pred_fallthru
      _
    // Predicated region
    $region6: #{tpu_custom_call.1} parent=1 // pred_check
      _
    $region7: #{tpu_custom_call.1} parent=1 // pred_check_branch
      %26 = sbr.rel (0) target = $region9
    $region8: #{tpu_custom_call.1} parent=1 // pred_region
      %s28 = ssub.s32 512, 512
      %29 = vsyncadd [#allocation6], %s28
      %s30 = sshll.u32 [#allocation5], 4
      %s31 = int_to_ptr.vmem [resolvable:$true] %s30
      %36 = dma.hbm_to_vmem [thread:$0]  %s1, 512, %s31, [#allocation6], 128, 128, 8
    $region9: #{tpu_custom_call.1} parent=1 // pred_fallthru
      _
    // Predicated region
    $region10: #{tpu_custom_call.1} parent=1 // pred_check
      _
    $region11: #{tpu_custom_call.1} parent=1 // pred_check_branch
      %38 = sbr.rel (0) target = $region13
    $region12: #{tpu_custom_call.1} parent=1 // pred_region
      _
    $region13: #{tpu_custom_call.1} parent=1 // pred_fallthru
      _
    // Predicated region
    $region14: #{tpu_custom_call.1} parent=1 // pred_check
      _
    $region15: #{tpu_custom_call.1} parent=1 // pred_check_branch
      %40 = sbr.rel (0) target = $region17
    $region16: #{tpu_custom_call.1} parent=1 // pred_region
      _
    $region17: #{tpu_custom_call.1} parent=1 // pred_fallthru
      _
    // Predicated region
    $region18: #{tpu_custom_call.1} parent=1 // pred_check
      _
    $region19: #{tpu_custom_call.1} parent=1 // pred_check_branch
      %42 = sbr.rel (0) target = $region21
    $region20: #{tpu_custom_call.1} parent=1 // pred_region
      _
    $region21: #{tpu_custom_call.1} parent=1 // pred_fallthru
      _
    // Predicated region
    $region22: #{tpu_custom_call.1} parent=1 // pred_check
      _
    $region23: #{tpu_custom_call.1} parent=1 // pred_check_branch
      %44 = sbr.rel (0) target = $region25
    $region24: #{tpu_custom_call.1} parent=1 // pred_region
      %45 = dma.done [#allocation3], 256
    $region25: #{tpu_custom_call.1} parent=1 // pred_fallthru
      _
    // Predicated region
    $region26: #{tpu_custom_call.1} parent=1 // pred_check
      _
    $region27: #{tpu_custom_call.1} parent=1 // pred_check_branch
      %47 = sbr.rel (0) target = $region29
    $region28: #{tpu_custom_call.1} parent=1 // pred_region
      %48 = dma.done [#allocation6], 512
    $region29: #{tpu_custom_call.1} parent=1 // pred_fallthru
      _
    %p50 = scmp.eq.s32.totalorder 0, 0
    // Predicated region
    $region30: #{tpu_custom_call.1} parent=1 // pred_check
      %p51 = pneg %p50
    $region31: #{tpu_custom_call.1} parent=1 // pred_check_branch
      %53 = sbr.rel (%p51) target = $region33
    $region32: #{tpu_custom_call.1} parent=1 // pred_region
      %v54 = vld [vmem:[%s4] sm:$0x1]
      %v56 = vlaneseq
      %v57 = vshrl.u32 %v56, 7
      %v58 = vsub.s32 0, %v57
      %v59 = vrot.slane %v54, %v58
      %61 = vst [vmem:[#allocation7] sm:$0xff] %v59
      %62 = vst [vmem:[#allocation7 + $0x8] sm:$0xff] %v59
    $region33: #{tpu_custom_call.1} parent=1 // pred_fallthru
      _
    %v63 = vld [vmem:[#allocation5] sm:$0xff]
    %v64 = vld [vmem:[#allocation5 + $0x8] sm:$0xff]
    %v65 = vld [vmem:[%s2] sm:$0x1]
    %v66 = vld [vmem:[%s3] sm:$0x1]
    %v67 = vand.u32 %v63, 15
    %v68 = vand.u32 %v64, 15
    %v69 = vshra.s32 %v63, 4
    %v70 = vshra.s32 %v64, 4
    %v71 = vand.u32 %v69, 15
    %v72 = vand.u32 %v70, 15
    %v73 = vshra.s32 %v63, 8
    %v74 = vshra.s32 %v64, 8
    %v75 = vand.u32 %v73, 15
    %v76 = vand.u32 %v74, 15
    %v77 = vshra.s32 %v63, 12
    %v78 = vshra.s32 %v64, 12
    %v79 = vand.u32 %v77, 15
    %v80 = vand.u32 %v78, 15
    %v81 = vshra.s32 %v63, 16
    %v82 = vshra.s32 %v64, 16
    %v83 = vand.u32 %v81, 15
    %v84 = vand.u32 %v82, 15
    %v85 = vshra.s32 %v63, 20
    %v86 = vshra.s32 %v64, 20
    %v87 = vand.u32 %v85, 15
    %v88 = vand.u32 %v86, 15
    %v89 = vshra.s32 %v63, 24
    %v90 = vshra.s32 %v64, 24
    %v91 = vand.u32 %v89, 15
    %v92 = vand.u32 %v90, 15
    %v93 = vshra.s32 %v63, 28
    %v94 = vshra.s32 %v64, 28
    %v95 = vand.u32 %v93, 15
    %v96 = vand.u32 %v94, 15
    %v97 = vcvt.s32.f32 %v67
    %v98 = vcvt.s32.f32 %v68
    %v99 = vcvt.s32.f32 %v71
    %v100 = vcvt.s32.f32 %v72
    %v101 = vcvt.s32.f32 %v75
    %v102 = vcvt.s32.f32 %v76
    %v103 = vcvt.s32.f32 %v79
    %v104 = vcvt.s32.f32 %v80
    %v105 = vcvt.s32.f32 %v83
    %v106 = vcvt.s32.f32 %v84
    %v107 = vcvt.s32.f32 %v87
    %v108 = vcvt.s32.f32 %v88
    %v109 = vcvt.s32.f32 %v91
    %v110 = vcvt.s32.f32 %v92
    %v111 = vcvt.s32.f32 %v95
    %v112 = vcvt.s32.f32 %v96
    %v113 = vlaneseq
    %v114 = vshrl.u32 %v113, 7
    %v115 = vsub.s32 0, %v114
    %v116 = vrot.slane %v65, %v115
    %v117 = vmul.f32 %v97, %v116
    %v118 = vmul.f32 %v98, %v116
    %v119 = vmul.f32 %v99, %v116
    %v120 = vmul.f32 %v100, %v116
    %v121 = vmul.f32 %v101, %v116
    %v122 = vmul.f32 %v102, %v116
    %v123 = vmul.f32 %v103, %v116
    %v124 = vmul.f32 %v104, %v116
    %v125 = vmul.f32 %v105, %v116
    %v126 = vmul.f32 %v106, %v116
    %v127 = vmul.f32 %v107, %v116
    %v128 = vmul.f32 %v108, %v116
    %v129 = vmul.f32 %v109, %v116
    %v130 = vmul.f32 %v110, %v116
    %v131 = vmul.f32 %v111, %v116
    %v132 = vmul.f32 %v112, %v116
    %v133 = vlaneseq
    %v134 = vshrl.u32 %v133, 7
    %v135 = vsub.s32 0, %v134
    %v136 = vrot.slane %v66, %v135
    %v137 = vadd.f32 %v117, %v136
    %v138 = vadd.f32 %v118, %v136
    %v139 = vadd.f32 %v119, %v136
    %v140 = vadd.f32 %v120, %v136
    %v141 = vadd.f32 %v121, %v136
    %v142 = vadd.f32 %v122, %v136
    %v143 = vadd.f32 %v123, %v136
    %v144 = vadd.f32 %v124, %v136
    %v145 = vadd.f32 %v125, %v136
    %v146 = vadd.f32 %v126, %v136
    %v147 = vadd.f32 %v127, %v136
    %v148 = vadd.f32 %v128, %v136
    %v149 = vadd.f32 %v129, %v136
    %v150 = vadd.f32 %v130, %v136
    %v151 = vadd.f32 %v131, %v136
    %v152 = vadd.f32 %v132, %v136
    %v153 = vpack.c.bf16 %v138, %v137
    %v154 = vpack.c.bf16 %v140, %v139
    %v155 = vpack.c.bf16 %v142, %v141
    %v156 = vpack.c.bf16 %v144, %v143
    %v157 = vpack.c.bf16 %v146, %v145
    %v158 = vpack.c.bf16 %v148, %v147
    %v159 = vpack.c.bf16 %v150, %v149
    %v160 = vpack.c.bf16 %v152, %v151
    %v161 = vld [vmem:[#allocation5 + $0x10] sm:$0xff]
    %v162 = vld [vmem:[#allocation5 + $0x18] sm:$0xff]
    %v163 = vld [vmem:[%s2 + $0x1] sm:$0x1]
    %v164 = vld [vmem:[%s3 + $0x1] sm:$0x1]
    %v165 = vand.u32 %v161, 15
    %v166 = vand.u32 %v162, 15
    %v167 = vshra.s32 %v161, 4
    %v168 = vshra.s32 %v162, 4
    %v169 = vand.u32 %v167, 15
    %v170 = vand.u32 %v168, 15
    %v171 = vshra.s32 %v161, 8
    %v172 = vshra.s32 %v162, 8
    %v173 = vand.u32 %v171, 15
    %v174 = vand.u32 %v172, 15
    %v175 = vshra.s32 %v161, 12
    %v176 = vshra.s32 %v162, 12
    %v177 = vand.u32 %v175, 15
    %v178 = vand.u32 %v176, 15
    %v179 = vshra.s32 %v161, 16
    %v180 = vshra.s32 %v162, 16
    %v181 = vand.u32 %v179, 15
    %v182 = vand.u32 %v180, 15
    %v183 = vshra.s32 %v161, 20
    %v184 = vshra.s32 %v162, 20
    %v185 = vand.u32 %v183, 15
    %v186 = vand.u32 %v184, 15
    %v187 = vshra.s32 %v161, 24
    %v188 = vshra.s32 %v162, 24
    %v189 = vand.u32 %v187, 15
    %v190 = vand.u32 %v188, 15
    %v191 = vshra.s32 %v161, 28
    %v192 = vshra.s32 %v162, 28
    %v193 = vand.u32 %v191, 15
    %v194 = vand.u32 %v192, 15
    %v195 = vcvt.s32.f32 %v165
    %v196 = vcvt.s32.f32 %v166
    %v197 = vcvt.s32.f32 %v169
    %v198 = vcvt.s32.f32 %v170
    %v199 = vcvt.s32.f32 %v173
    %v200 = vcvt.s32.f32 %v174
    %v201 = vcvt.s32.f32 %v177
    %v202 = vcvt.s32.f32 %v178
    %v203 = vcvt.s32.f32 %v181
    %v204 = vcvt.s32.f32 %v182
    %v205 = vcvt.s32.f32 %v185
    %v206 = vcvt.s32.f32 %v186
    %v207 = vcvt.s32.f32 %v189
    %v208 = vcvt.s32.f32 %v190
    %v209 = vcvt.s32.f32 %v193
    %v210 = vcvt.s32.f32 %v194
    %v211 = vlaneseq
    %v212 = vshrl.u32 %v211, 7
    %v213 = vsub.s32 0, %v212
    %v214 = vrot.slane %v163, %v213
    %v215 = vmul.f32 %v195, %v214
    %v216 = vmul.f32 %v196, %v214
    %v217 = vmul.f32 %v197, %v214
    %v218 = vmul.f32 %v198, %v214
    %v219 = vmul.f32 %v199, %v214
    %v220 = vmul.f32 %v200, %v214
    %v221 = vmul.f32 %v201, %v214
    %v222 = vmul.f32 %v202, %v214
    %v223 = vmul.f32 %v203, %v214
    %v224 = vmul.f32 %v204, %v214
    %v225 = vmul.f32 %v205, %v214
    %v226 = vmul.f32 %v206, %v214
    %v227 = vmul.f32 %v207, %v214
    %v228 = vmul.f32 %v208, %v214
    %v229 = vmul.f32 %v209, %v214
    %v230 = vmul.f32 %v210, %v214
    %v231 = vlaneseq
    %v232 = vshrl.u32 %v231, 7
    %v233 = vsub.s32 0, %v232
    %v234 = vrot.slane %v164, %v233
    %v235 = vadd.f32 %v215, %v234
    %v236 = vadd.f32 %v216, %v234
    %v237 = vadd.f32 %v217, %v234
    %v238 = vadd.f32 %v218, %v234
    %v239 = vadd.f32 %v219, %v234
    %v240 = vadd.f32 %v220, %v234
    %v241 = vadd.f32 %v221, %v234
    %v242 = vadd.f32 %v222, %v234
    %v243 = vadd.f32 %v223, %v234
    %v244 = vadd.f32 %v224, %v234
    %v245 = vadd.f32 %v225, %v234
    %v246 = vadd.f32 %v226, %v234
    %v247 = vadd.f32 %v227, %v234
    %v248 = vadd.f32 %v228, %v234
    %v249 = vadd.f32 %v229, %v234
    %v250 = vadd.f32 %v230, %v234
    %v251 = vpack.c.bf16 %v236, %v235
    %v252 = vpack.c.bf16 %v238, %v237
    %v253 = vpack.c.bf16 %v240, %v239
    %v254 = vpack.c.bf16 %v242, %v241
    %v255 = vpack.c.bf16 %v244, %v243
    %v256 = vpack.c.bf16 %v246, %v245
    %v257 = vpack.c.bf16 %v248, %v247
    %v258 = vpack.c.bf16 %v250, %v249
    %v259 = vld [vmem:[#allocation7] sm:$0xff]
    %v260 = vld [vmem:[#allocation7 + $0x8] sm:$0xff]
    %v261 = vld [vmem:[#allocation2] sm:$0xff]
    %v262 = vld [vmem:[#allocation2 + $0x8] sm:$0xff]
    %v265 = vunpack.c.l.b16 %v261
    %v266 = vunpack.c.h.b16 %v261
    %v267 = vunpack.c.l.b16 %v262
    %v268 = vunpack.c.h.b16 %v262
    %v269 = vpack.c.b16 %v267, %v265
    %v270 = vpack.c.b16 %v268, %v266
    %273 = vmatprep.subr.bf16.mxu0 0
    %274 = vmatpush1.bf16.msra.mxu0 %v153
    %275 = vmatprep.subr.bf16.mxu0 0
    %276 = vmatpush1.bf16.msra.mxu0 %v154
    %277 = vmatprep.subr.bf16.mxu0 0
    %278 = vmatpush1.bf16.msra.mxu0 %v155
    %279 = vmatprep.subr.bf16.mxu0 0
    %280 = vmatpush1.bf16.msra.mxu0 %v156
    %281 = vmatprep.subr.bf16.mxu0 0
    %282 = vmatpush1.bf16.msra.mxu0 %v157
    %283 = vmatprep.subr.bf16.mxu0 0
    %284 = vmatpush1.bf16.msra.mxu0 %v158
    %285 = vmatprep.subr.bf16.mxu0 0
    %286 = vmatpush1.bf16.msra.mxu0 %v159
    %287 = vmatprep.subr.bf16.mxu0 0
    %288 = vmatpush1.bf16.msra.mxu0 %v160
    %289 = vmatprep.subr.bf16.mxu0 0
    %290 = vmatpush1.bf16.msra.mxu0 %v251
    %291 = vmatprep.subr.bf16.mxu0 0
    %292 = vmatpush1.bf16.msra.mxu0 %v252
    %293 = vmatprep.subr.bf16.mxu0 0
    %294 = vmatpush1.bf16.msra.mxu0 %v253
    %295 = vmatprep.subr.bf16.mxu0 0
    %296 = vmatpush1.bf16.msra.mxu0 %v254
    %297 = vmatprep.subr.bf16.mxu0 0
    %298 = vmatpush1.bf16.msra.mxu0 %v255
    %299 = vmatprep.subr.bf16.mxu0 0
    %300 = vmatpush1.bf16.msra.mxu0 %v256
    %301 = vmatprep.subr.bf16.mxu0 0
    %302 = vmatpush1.bf16.msra.mxu0 %v257
    %303 = vmatprep.subr.bf16.mxu0 0
    %304 = vmatpush1.bf16.msra.mxu0 %v258
    %305 = vmatprep.mubr.bf16.mxu0 %v270
    %306 = vmatmul.mubr.bf16.gmra.mrb[0].mxu0 %v269
    %v307 = vpop.f32.mrb[0].mxu0
    %v308 = vadd.f32 0.0, %v307
    %v309 = vpop.f32.mrb[0].mxu0
    %v310 = vpop.f32.mrb[0].mxu0
    %v311 = vadd.f32 0.0, %v310
    %v312 = vpop.f32.mrb[0].mxu0
    %313 = vdwg.mxu0
    %v314 = vadd.f32 %v259, %v308
    %v315 = vadd.f32 %v260, %v311
    %316 = vst [vmem:[#allocation7] sm:$0xff] %v314
    %317 = vst [vmem:[#allocation7 + $0x8] sm:$0xff] %v315
    // Predicated region
    $region34: #{tpu_custom_call.1} parent=1 // pred_check
      _
    $region35: #{tpu_custom_call.1} parent=1 // pred_check_branch
      %319 = sbr.rel (0) target = $region37
    $region36: #{tpu_custom_call.1} parent=1 // pred_region
      %s321 = ssub.s32 256, 256
      %322 = vsyncadd [#allocation4], %s321
      %s323 = sshll.u32 [#allocation7], 4
      %s324 = int_to_ptr.vmem [resolvable:$true] %s323
      %329 = dma.vmem_to_hbm [thread:$0]  %s324, 256, %s5, [#allocation4], 128, 128, 8
    $region37: #{tpu_custom_call.1} parent=1 // pred_fallthru
      _
    // Predicated region
    $region38: #{tpu_custom_call.1} parent=1 // pred_check
      _
    $region39: #{tpu_custom_call.1} parent=1 // pred_check_branch
      %331 = sbr.rel (0) target = $region41
    $region40: #{tpu_custom_call.1} parent=1 // pred_region
      %332 = dma.done [#allocation4], 256
    $region41: #{tpu_custom_call.1} parent=1 // pred_fallthru
      _
    %333 = vsyncpa [#allocation3], 1
    %334 = vsyncpa [#allocation6], 1
    %335 = vsyncpa [#allocation4], 1

</llo_original>
